<compile_context>
chip_gen: v5e
topology: v5e:2x2
jax: 0.10.0
libtpu: 0.0.40
codegen_flags: <defaults>
</compile_context>

<pallas_src>
import jax
import jax.numpy as jnp
from jax.experimental import pallas as pl
from jax.experimental.pallas import tpu as pltpu


DEFAULT_TILE_B = 1024
DEFAULT_TILE_D = 4096
DEFAULT_VMEM_BUDGET = 48 << 20       # fits v7x's 64 MiB physical VMEM


def _round_up(n, m):
    return ((n + m - 1) // m) * m


def _cdiv(a, b):
    return (a + b - 1) // b


# ---------------------------------------------------------------------------
# Kernels
# ---------------------------------------------------------------------------

def _gradpca_kernel_single(x_ref, w_ref, b_ref, o_ref):
    """Untiled-D fast path: one MXU pass, f32 accumulate, f32 bias add, store."""
    o_ref[...] = (
        jnp.dot(x_ref[...], w_ref[...], preferred_element_type=jnp.float32)
        + b_ref[...]
    ).astype(o_ref.dtype)


def _make_gradpca_kernel_tiled(d_rem):
    """Tiled-D path with an f32 VMEM accumulator.

    d_rem (static Python int): number of valid columns in the last D tile.
    0 means D divides tile_d exactly and no masking code is emitted at all.
    """

    def kernel(x_ref, w_ref, b_ref, o_ref, acc_ref):
        k = pl.program_id(1)
        nk = pl.num_programs(1)

        @pl.when(k == 0)
        def _init():
            acc_ref[...] = jnp.zeros_like(acc_ref)

        def _accumulate(x_tile):
            acc_ref[...] += jnp.dot(
                x_tile, w_ref[...], preferred_element_type=jnp.float32)

        if d_rem == 0:
            _accumulate(x_ref[...])
        else:
            # The last D tile is partial: out-of-bounds x columns are
            # unspecified (could even be NaN bit patterns), so zero them before
            # the MXU.  The matching W rows are zero-padded, so the product is
            # exactly 0 there.  Masking only runs on the last k step.
            is_last = k == nk - 1

            @pl.when(jnp.logical_not(is_last))
            def _full():
                _accumulate(x_ref[...])

            @pl.when(is_last)
            def _ragged():
                xv = x_ref[...]
                col = jax.lax.broadcasted_iota(jnp.int32, xv.shape, 1)
                _accumulate(jnp.where(col < d_rem, xv, jnp.zeros_like(xv)))

        @pl.when(k == nk - 1)
        def _finalize():
            o_ref[...] = (acc_ref[...] + b_ref[...]).astype(o_ref.dtype)

    return kernel


# ---------------------------------------------------------------------------
# One-time parameter setup (keep OUT of the hot loop)
# ---------------------------------------------------------------------------

def gradpca_prepare(W, shortcut_weight, shortcut_bias, *, lane_pad=128,
                    tile_d=DEFAULT_TILE_D, weight_dtype=None):
    """QR + shortcut-Linear fusion + padding, hoisted out of the per-call path.

    W:               (input_size, n_components)
    shortcut_weight: (latent, n_components)   -- nn.Linear layout
    shortcut_bias:   (latent,)

    Returns (W_fused, bias, n_latent):
      W_fused: (D or D_pad, L_pad) fused matrix, lane-padded to a multiple of
               128 so output stores are unmasked; when D > tile_d its rows are
               additionally zero-padded to a multiple of the D tile so the
               apply-time kernel never has to pad or copy x.
      bias:    (1, L_pad) float32.
    """
    Wp, _ = jnp.linalg.qr(W)                       # (D, K), data independent
    # TODO(synk): torch.qr / jnp.linalg.qr agree only up to per-column sign.
    W_fused = Wp @ shortcut_weight.T               # (D, L)
    D, L = W_fused.shape
    L_pad = _round_up(max(L, lane_pad), lane_pad)
    W_fused = jnp.pad(W_fused, ((0, 0), (0, L_pad - L)))
    td = _round_up(max(int(tile_d), 128), 128)
    if D > td:
        W_fused = jnp.pad(W_fused, ((0, _round_up(D, td) - D), (0, 0)))
    if weight_dtype is not None:
        W_fused = W_fused.astype(weight_dtype)
    bias = jnp.pad(shortcut_bias.astype(jnp.float32), (0, L_pad - L))
    return W_fused, bias.reshape(1, L_pad), L


# ---------------------------------------------------------------------------
# Per-call forward
# ---------------------------------------------------------------------------

def gradpca_apply(x, W_fused, bias, n_latent, *,
                  tile_b=DEFAULT_TILE_B, tile_d=DEFAULT_TILE_D,
                  compute_dtype=None, out_dtype=None,
                  vmem_budget_bytes=DEFAULT_VMEM_BUDGET,
                  prefer_resident_weights=True,
                  resident_weight_buffers=2):
    """z = x @ W_fused + bias, returned as (B, n_latent).

    x is streamed from HBM as-is (no pad / cast copy).  Store x as bfloat16
    upstream for ~2x HBM-byte reduction on every generation (f32 MXU
    accumulation and f32 bias add are kept).  Explicitly passing a
    compute_dtype different from x.dtype forces one extra cast pass over x.
    """
    if x.ndim != 2:
        raise RuntimeError("x should be a 2d tensor.")
    B, D = x.shape
    if W_fused.ndim != 2 or W_fused.shape[0] < D:
        raise ValueError("W_fused must have at least as many rows as x has columns")
    L_pad = W_fused.shape[1]

    compute_dtype = jnp.dtype(x.dtype if compute_dtype is None else compute_dtype)
    out_dtype = jnp.dtype(x.dtype if out_dtype is None else out_dtype)
    in_isz = compute_dtype.itemsize
    out_isz = out_dtype.itemsize

    if x.dtype != compute_dtype:
        # NOTE: full extra HBM pass over x — prefer storing x in compute_dtype.
        x = x.astype(compute_dtype)

    # ---- choose tiles against an explicit VMEM budget ----------------------
    sub = max(8, 32 // in_isz)                      # sublane multiple per dtype
    tile_b = _round_up(min(int(tile_b), max(B, 1)), sub)
    if B > sub:                                     # >=2 batch tiles when possible
        tile_b = min(tile_b, _round_up(_cdiv(B, 2), sub))   # v7x: feed both TCs
    tile_b = max(8, min(tile_b, _round_up(B, 8)))
    tile_d_aligned = _round_up(max(int(tile_d), 128), 128)

    def plan_bytes(tb, td, tiled):
        w_bufs = 2 if tiled else max(1, int(resident_weight_buffers))
        n = 2 * tb * td * in_isz                    # x tile, double buffered
        n += w_bufs * td * L_pad * in_isz           # fused weight
        n += 2 * L_pad * 4                          # bias (f32)
        n += 2 * tb * L_pad * out_isz               # output tile
        if tiled:
            n += tb * L_pad * 4                     # f32 accumulator scratch
        return n

    untiled = D <= tile_d_aligned or (
        prefer_resident_weights
        and plan_bytes(tile_b, D, False) <= vmem_budget_bytes)
    tile_d_eff = D if untiled else tile_d_aligned
    while (plan_bytes(tile_b, tile_d_eff, not untiled) > vmem_budget_bytes
           and tile_b > sub):
        tile_b = max(sub, _round_up(tile_b // 2, sub))

    # ---- assemble weight / bias operands (x is streamed untouched) ---------
    wk = W_fused
    if untiled:
        if wk.shape[0] != D:
            wk = wk[:D]                 # prepare() padded rows for a tiled layout
        grid = (_cdiv(B, tile_b),)
        d_rem = 0
    else:
        grid_k = _cdiv(D, tile_d_eff)
        need = grid_k * tile_d_eff
        if wk.shape[0] < need:
            # Cheap (W is tiny vs x); pass tile_d to gradpca_prepare to avoid.
            wk = jnp.pad(wk, ((0, need - wk.shape[0]), (0, 0)))
        grid = (_cdiv(B, tile_b), grid_k)
        d_rem = D % tile_d_eff
    if wk.dtype != compute_dtype:
        wk = wk.astype(compute_dtype)
    bias_f32 = bias.astype(jnp.float32).reshape(1, -1)
    if bias_f32.shape[1] != L_pad:
        bias_f32 = jnp.pad(bias_f32, ((0, 0), (0, L_pad - bias_f32.shape[1])))

    # ---- specs --------------------------------------------------------------
    w_pipeline = {}
    if untiled and int(resident_weight_buffers) == 1:
        # Grid-constant blocks gain nothing from double buffering; single
        # buffering reclaims one W-sized VMEM buffer (matters for large D on
        # v7x's 64 MiB VMEM).  Opt-in via resident_weight_buffers=1.
        w_pipeline = dict(pipeline_mode=pl.Buffered(1))

    if untiled:
        kernel = _gradpca_kernel_single
        in_specs = [
            pl.BlockSpec((tile_b, D), lambda i: (i, 0)),                 # x tile
            pl.BlockSpec((D, L_pad), lambda i: (0, 0), **w_pipeline),    # fused W
            pl.BlockSpec((1, L_pad), lambda i: (0, 0), **w_pipeline),    # bias
        ]
        out_specs = pl.BlockSpec((tile_b, L_pad), lambda i: (i, 0))
        scratch_shapes = []
        dim_sem = ("parallel",)
    else:
        kernel = _make_gradpca_kernel_tiled(d_rem)
        in_specs = [
            pl.BlockSpec((tile_b, tile_d_eff), lambda i, k: (i, k)),     # x tile
            pl.BlockSpec((tile_d_eff, L_pad), lambda i, k: (k, 0)),      # fused W
            pl.BlockSpec((1, L_pad), lambda i, k: (0, 0)),               # bias
        ]
        out_specs = pl.BlockSpec((tile_b, L_pad), lambda i, k: (i, 0))
        scratch_shapes = [pltpu.VMEM((tile_b, L_pad), jnp.float32)]
        dim_sem = ("parallel", "arbitrary")

    plan = plan_bytes(tile_b, tile_d_eff, not untiled)
    vmem_limit = max(int(plan * 1.2) + (1 << 20), 32 << 20)

    # Advisory cost hint: when D is tiled, the fused weight is re-streamed once
    # per batch tile.
    w_reads = 1 if untiled else _cdiv(B, tile_b)
    cost = pl.CostEstimate(
        flops=2 * B * D * L_pad,
        transcendentals=0,
        bytes_accessed=(B * D * in_isz
                        + w_reads * wk.shape[0] * L_pad * in_isz
                        + L_pad * 4
                        + B * L_pad * out_isz),
    )

    z = pl.pallas_call(
        kernel,
        out_shape=jax.ShapeDtypeStruct((B, L_pad), out_dtype),
        grid_spec=pltpu.PrefetchScalarGridSpec(
            num_scalar_prefetch=0,
            grid=grid,
            in_specs=in_specs,
            out_specs=out_specs,
            scratch_shapes=scratch_shapes,
        ),
        compiler_params=pltpu.CompilerParams(
            dimension_semantics=dim_sem,
            vmem_limit_bytes=vmem_limit,
        ),
        cost_estimate=cost,
    )(x, wk, bias_f32)

    return z[:, :n_latent]


def gradpca_forward(x, W, shortcut_weight, shortcut_bias, **kwargs):
    """Convenience wrapper matching the PyTorch forward signature.

    WARNING: recomputes QR + weight fusion on every call.  In a training /
    inference hot loop, call gradpca_prepare() once and gradpca_apply() per
    step instead — otherwise the fusion/hoisting win is lost.
    """
    W_fused, bias, n_latent = gradpca_prepare(W, shortcut_weight, shortcut_bias)
    return gradpca_apply(x, W_fused, bias, n_latent, **kwargs)


if __name__ == "__main__":
    # Small shapes consistent with the module's forward (2-D input).
    batch = 8
    input_size = 32
    n_components = 8
    latent_space_size = 16

    key = jax.random.PRNGKey(0)
    k_x, k_w, k_sw, k_sb, k_x2, k_w2 = jax.random.split(key, 6)

    x = jax.random.normal(k_x, (batch, input_size), dtype=jnp.float32)
    W = 0.1 * jax.random.normal(k_w, (input_size, n_components), dtype=jnp.float32)
    # nn.Linear(n_components, latent): weight (latent, K), bias (latent,)
    bound = 1.0 / jnp.sqrt(n_components)
    shortcut_weight = jax.random.uniform(
        k_sw, (latent_space_size, n_components), minval=-bound, maxval=bound,
        dtype=jnp.float32)
    shortcut_bias = jax.random.uniform(
        k_sb, (latent_space_size,), minval=-bound, maxval=bound, dtype=jnp.float32)

    # One-time parameter setup (QR + shortcut fusion + lane padding).
    W_fused, bias, L = gradpca_prepare(W, shortcut_weight, shortcut_bias)

    # Pure-JAX reference (same math as the PyTorch forward).
    Wp, _ = jnp.linalg.qr(W)
    z_ref = (x @ Wp) @ shortcut_weight.T + shortcut_bias

    # 1) f32 streaming, untiled-D fast path (grid-resident fused weight).
    z = jax.block_until_ready(gradpca_apply(x, W_fused, bias, L))
    assert z.shape == (batch, latent_space_size)
    assert jnp.allclose(z, z_ref, atol=1e-5, rtol=1e-5), "f32 mismatch"

    # 2) bf16 streaming: x stored as bf16 upstream -> no cast pass, halved HBM
    #    bytes; MXU accumulation and bias add stay f32.
    x_bf16 = x.astype(jnp.bfloat16)
    z_bf = jax.block_until_ready(
        gradpca_apply(x_bf16, W_fused, bias, L, out_dtype=jnp.float32))
    # Tight regression guard: reference using the SAME bf16-rounded operands.
    wq = W_fused.astype(jnp.bfloat16).astype(jnp.float32)
    z_bf_ref = (x_bf16.astype(jnp.float32) @ wq)[:, :L] + shortcut_bias
    assert jnp.allclose(z_bf, z_bf_ref, atol=1e-4, rtol=1e-4), "bf16 kernel mismatch"
    # Quantization drift vs. full-precision math (~sqrt(D) * 2^-8 relative).
    assert jnp.allclose(z_bf, z_ref, atol=2e-2, rtol=2e-2), "bf16 drift too large"

    # 3) Tiled-D path with ragged B and D: exercises the f32 accumulator kernel,
    #    the in-kernel D-remainder masking and the masked batch-boundary store.
    B2, D2 = 12, 200
    x2 = jax.random.normal(k_x2, (B2, D2), dtype=jnp.float32)
    W2 = 0.1 * jax.random.normal(k_w2, (D2, n_components), dtype=jnp.float32)
    Wf2, bias2, L2 = gradpca_prepare(W2, shortcut_weight, shortcut_bias, tile_d=128)
    z2 = jax.block_until_ready(
        gradpca_apply(x2, Wf2, bias2, L2, tile_d=128,
                      prefer_resident_weights=False))
    Wp2, _ = jnp.linalg.qr(W2)
    z2_ref = (x2 @ Wp2) @ shortcut_weight.T + shortcut_bias
    assert z2.shape == (B2, latent_space_size)
    assert jnp.allclose(z2, z2_ref, atol=1e-4, rtol=1e-4), "tiled-D mismatch"

    print("KERNEL_OK")
</pallas_src>

<mosaic_0001>
module attributes {stable_mosaic.version = 11 : i64} {
  func.func @_gradpca_kernel_single(%arg0: i32, %arg1: memref<8x32xf32, #tpu.memory_space<vmem>>, %arg2: memref<32x128xf32, #tpu.memory_space<vmem>>, %arg3: memref<1x128xf32, #tpu.memory_space<vmem>>, %arg4: memref<8x128xf32, #tpu.memory_space<vmem>>) attributes {dimension_semantics = [#tpu.dimension_semantics<parallel>], iteration_bounds = array<i64: 1>, scalar_prefetch = 0 : i64, scratch_operands = 0 : i64, tpu.core_type = #tpu.core_type<tc>, window_params = [{transform_indices = @transform_0, window_bounds = array<i64: 8, 32>}, {pipeline_mode = #tpu.pipeline_mode<synchronous>, transform_indices = @transform_1, window_bounds = array<i64: 32, 128>}, {pipeline_mode = #tpu.pipeline_mode<synchronous>, transform_indices = @transform_2, window_bounds = array<i64: 1, 128>}, {transform_indices = @transform_3, window_bounds = array<i64: 8, 128>}]} {
    %c0 = arith.constant 0 : index
    %c0_0 = arith.constant 0 : index
    %0 = vector.load %arg1[%c0, %c0_0] : memref<8x32xf32, #tpu.memory_space<vmem>>, vector<8x32xf32>
    %c0_1 = arith.constant 0 : index
    %c0_2 = arith.constant 0 : index
    %1 = vector.load %arg2[%c0_1, %c0_2] : memref<32x128xf32, #tpu.memory_space<vmem>>, vector<32x128xf32>
    %cst = arith.constant dense<0.000000e+00> : vector<8x128xf32>
    %2 = tpu.matmul %0, %1, %cst {dimension_numbers = #tpu.dot_dimension_numbers<[1], [0], [0], [1], [0, 0, 1, 1], [], []>} : vector<8x32xf32>, vector<32x128xf32>, vector<8x128xf32> -> vector<8x128xf32>
    %c0_3 = arith.constant 0 : index
    %c0_4 = arith.constant 0 : index
    %3 = vector.load %arg3[%c0_3, %c0_4] : memref<1x128xf32, #tpu.memory_space<vmem>>, vector<1x128xf32>
    %4 = vector.broadcast %3 : vector<1x128xf32> to vector<8x128xf32>
    %5 = arith.addf %2, %4 : vector<8x128xf32>
    %c0_5 = arith.constant 0 : index
    %c0_6 = arith.constant 0 : index
    %6 = vector.load %arg4[%c0_5, %c0_6] : memref<8x128xf32, #tpu.memory_space<vmem>>, vector<8x128xf32>
    tpu.vector_store %arg4[%c0_5, %c0_6], %5 {strides = array<i32>} : memref<8x128xf32, #tpu.memory_space<vmem>>, vector<8x128xf32>,
    return
  }
  func.func @transform_0(%arg0: i32) -> (i32, i32) {
    %c0_i32 = arith.constant 0 : i32
    %c0_i32_0 = arith.constant 0 : i32
    return %arg0, %c0_i32 : i32, i32
  }
  func.func @transform_1(%arg0: i32) -> (i32, i32) {
    %c0_i32 = arith.constant 0 : i32
    %c0_i32_0 = arith.constant 0 : i32
    %c0_i32_1 = arith.constant 0 : i32
    return %c0_i32, %c0_i32_0 : i32, i32
  }
  func.func @transform_2(%arg0: i32) -> (i32, i32) {
    %c0_i32 = arith.constant 0 : i32
    %c0_i32_0 = arith.constant 0 : i32
    %c0_i32_1 = arith.constant 0 : i32
    return %c0_i32, %c0_i32_0 : i32, i32
  }
  func.func @transform_3(%arg0: i32) -> (i32, i32) {
    %c0_i32 = arith.constant 0 : i32
    %c0_i32_0 = arith.constant 0 : i32
    return %arg0, %c0_i32 : i32, i32
  }
}

</mosaic_0001>

<llo_original>
// kernel: tpu_custom_call.1
$region0: #{tpu_custom_call.1}
  #allocation0 [shape = 'u32[]', space=smem, size = 0x4, offset = 0x4, fixed_abs, tag = 'smem constant byte address 0x4 - core index']
  #allocation1 [shape = 'u32[72,128]{1,0:T(1,128)}', space=vmem, size = 0x9000, scoped, tag = 'internal scratch']
  %s0 = inlined_call_operand.hbm [shape: f32[8,32], index: 0, kind: input, shape index: {}]
  %s1 = inlined_call_operand.hbm [shape: f32[32,128], index: 1, kind: input, shape index: {}]
  %s2 = inlined_call_operand.vmem [shape: f32[1,128], index: 2, kind: input, shape index: {}]
  %s3 = inlined_call_operand.hbm [shape: f32[8,128], index: 3, kind: output, shape index: {}]
  %s4 = sld [smem:[#allocation0]]
  $region30: #{tpu_custom_call.1} parent=0
    _
  %s6 = ssub.s32 1, %s4
  %s7 = scalar_select 0, %s6, %s4
  $region1: #{tpu_custom_call.1} parent=0
    #allocation2 [shape = 'u8[4096]{0}', space=vmem, size = 0x1000, scoped, tag = 'input window, operand 0, single buffered']
    #allocation3 [shape = 's32[1]{0}', space=sflag, size = 0x4, scoped, tag = 'scoped memory for tpu_custom_call.1']
    #allocation4 [shape = 's32[1]{0}', space=sflag, size = 0x4, scoped, tag = 'scoped memory for tpu_custom_call.1']
    #allocation5 [shape = 'u8[16384]{0}', space=vmem, size = 0x4000, scoped, tag = 'input window, operand 1, single buffered']
    #allocation6 [shape = 's32[1]{0}', space=sflag, size = 0x4, scoped, tag = 'scoped memory for tpu_custom_call.1']
    #allocation7 [shape = 'u8[4096]{0}', space=vmem, size = 0x1000, scoped, tag = 'output window, operand 0, single buffered']
    %8 = vsyncpa [#allocation3], 0
    %9 = vsyncpa [#allocation6], 0
    %10 = vsyncpa [#allocation4], 0
    // Predicated region
    $region2: #{tpu_custom_call.1} parent=1 // pred_check
      _
    $region3: #{tpu_custom_call.1} parent=1 // pred_check_branch
      %12 = sbr.rel (0) target = $region5
    $region4: #{tpu_custom_call.1} parent=1 // pred_region
      %14 = vsyncadd [#allocation3], 0
      %s16 = sshll.u32 %s0, 4
      %s17 = int_to_ptr.hbm [resolvable:$true] %s16
      %s18 = sshll.u32 [#allocation2], 4
      %s19 = int_to_ptr.vmem [resolvable:$true] %s18
      %21 = dma.hbm_to_vmem [thread:$0]  %s17, 128, %s19, [#allocation3]
    $region5: #{tpu_custom_call.1} parent=1 // pred_fallthru
      _
    // Predicated region
    $region6: #{tpu_custom_call.1} parent=1 // pred_check
      _
    $region7: #{tpu_custom_call.1} parent=1 // pred_check_branch
      %23 = sbr.rel (0) target = $region9
    $region8: #{tpu_custom_call.1} parent=1 // pred_region
      %25 = vsyncadd [#allocation6], 0
      %s26 = sshll.u32 %s1, 4
      %s27 = int_to_ptr.hbm [resolvable:$true] %s26
      %s28 = sshll.u32 [#allocation5], 4
      %s29 = int_to_ptr.vmem [resolvable:$true] %s28
      %34 = dma.hbm_to_vmem [thread:$0]  %s27, 512, %s29, [#allocation6], 128, 128, 8
    $region9: #{tpu_custom_call.1} parent=1 // pred_fallthru
      _
    // Predicated region
    $region10: #{tpu_custom_call.1} parent=1 // pred_check
      _
    $region11: #{tpu_custom_call.1} parent=1 // pred_check_branch
      %36 = sbr.rel (0) target = $region13
    $region12: #{tpu_custom_call.1} parent=1 // pred_region
      _
    $region13: #{tpu_custom_call.1} parent=1 // pred_fallthru
      _
    // Predicated region
    $region14: #{tpu_custom_call.1} parent=1 // pred_check
      _
    $region15: #{tpu_custom_call.1} parent=1 // pred_check_branch
      %38 = sbr.rel (0) target = $region17
    $region16: #{tpu_custom_call.1} parent=1 // pred_region
      %40 = dma.done [#allocation3], 128
    $region17: #{tpu_custom_call.1} parent=1 // pred_fallthru
      _
    // Predicated region
    $region18: #{tpu_custom_call.1} parent=1 // pred_check
      _
    $region19: #{tpu_custom_call.1} parent=1 // pred_check_branch
      %42 = sbr.rel (0) target = $region21
    $region20: #{tpu_custom_call.1} parent=1 // pred_region
      %44 = dma.done [#allocation6], 512
    $region21: #{tpu_custom_call.1} parent=1 // pred_fallthru
      _
    %v45 = vld [vmem:[#allocation2] sm:$0xff]
    %v46 = vld [vmem:[#allocation5] sm:$0xff]
    %v47 = vld [vmem:[#allocation5 + $0x8] sm:$0xff]
    %v48 = vld [vmem:[#allocation5 + $0x10] sm:$0xff]
    %v49 = vld [vmem:[#allocation5 + $0x18] sm:$0xff]
    %v50 = vld [vmem:[%s2] sm:$0x1]
    %v52 = vperm.slane %v50, 0
    %vm54 = vcmask 261120
    %v56 = vsel %vm54, %v45, 0
    %58 = vmatpush.msra.mxu0 0.0
    %59 = vmatpush.msra.mxu0 0.0
    %60 = vmatpush.msra.mxu0 0.0
    %61 = vmatpush.msra.mxu0 0.0
    %62 = vmatpush.msra.mxu0 0.0
    %63 = vmatpush.msra.mxu0 0.0
    %64 = vmatpush.msra.mxu0 0.0
    %65 = vmatpush.msra.mxu0 0.0
    %66 = vmatpush.msra.mxu0 0.0
    %67 = vmatpush.msra.mxu0 0.0
    %68 = vmatpush.msra.mxu0 0.0
    %69 = vmatpush.msra.mxu0 0.0
    %70 = vmatpush.msra.mxu0 %v49
    %71 = vmatpush.msra.mxu0 %v48
    %72 = vmatpush.msra.mxu0 %v47
    %73 = vmatpush.msra.mxu0 %v46
    %74 = vmatmul.f32.gmra.mxu0 %v56
    %v75 = vpop.f32.mrf.mxu0
    %v76 = vadd.f32 %v52, %v75
    %77 = vdwg.mxu0
    %78 = vst [vmem:[#allocation7] sm:$0xff] %v76
    // Predicated region
    $region22: #{tpu_custom_call.1} parent=1 // pred_check
      _
    $region23: #{tpu_custom_call.1} parent=1 // pred_check_branch
      %80 = sbr.rel (0) target = $region25
    $region24: #{tpu_custom_call.1} parent=1 // pred_region
      %82 = vsyncadd [#allocation4], 0
      %s84 = sshll.u32 [#allocation7], 4
      %s85 = int_to_ptr.vmem [resolvable:$true] %s84
      %s86 = sshll.u32 %s3, 4
      %s87 = int_to_ptr.hbm [resolvable:$true] %s86
      %89 = dma.vmem_to_hbm [thread:$0]  %s85, 128, %s87, [#allocation4]
    $region25: #{tpu_custom_call.1} parent=1 // pred_fallthru
      _
    // Predicated region
    $region26: #{tpu_custom_call.1} parent=1 // pred_check
      _
    $region27: #{tpu_custom_call.1} parent=1 // pred_check_branch
      %91 = sbr.rel (0) target = $region29
    $region28: #{tpu_custom_call.1} parent=1 // pred_region
      %93 = dma.done [#allocation4], 128
    $region29: #{tpu_custom_call.1} parent=1 // pred_fallthru
      _
    %94 = vsyncpa [#allocation3], 1
    %95 = vsyncpa [#allocation6], 1
    %96 = vsyncpa [#allocation4], 1

</llo_original>
